<compile_context>
chip_gen: v5e
topology: v5e:2x2
jax: 0.10.0
libtpu: 0.0.40
codegen_flags: <defaults>
</compile_context>

<pallas_src>
import jax
import jax.numpy as jnp
from jax.experimental import pallas as pl
from jax.experimental.pallas import tpu as pltpu

LANE = 128                        # TPU lane width
N_OUT = 3                         # final output features
VMEM_BUDGET = 48 * 1024 * 1024    # leave headroom inside v7x's 64 MiB VMEM


def _round_up(x, m):
    return (x + m - 1) // m * m


def _vmem_bytes(tile, D, x_itemsize):
    """Rough VMEM footprint: double-buffered streamed x / transposed output,
    resident weights (double-buffered by default), f32 intermediates."""
    streamed_x = 2 * tile * D * x_itemsize
    streamed_o = 2 * N_OUT * tile * 4
    weights = 2 * 4 * (D * 256 + 256 + 256 * 64 + 64 + N_OUT * 64 + N_OUT)
    interm = 4 * tile * (256 + 64 + N_OUT)
    return streamed_x + streamed_o + weights + interm


def _choose_batch_tile(B, batch_tile, D, x_itemsize):
    """Batch tile is the lane dim of the transposed output block, so it must
    be a multiple of 128 unless it covers the whole batch (full-array block)."""
    if B < 2 * LANE:
        return B                                  # one full-array tile; grid == 1
    batch_tile = max(LANE, _round_up(batch_tile, LANE))
    # Cap so the grid has >= 2 steps (v7x: shard across both TensorCores).
    tile = min(batch_tile, _round_up(-(-B // 2), LANE))
    # Shrink to the VMEM budget (v7x has only 64 MiB physical VMEM).
    while tile > LANE and _vmem_bytes(tile, D, x_itemsize) > VMEM_BUDGET:
        tile -= LANE
    # TODO(synk): for very large D (weights alone > budget) add a K-tiled grid
    # axis with a VMEM accumulator instead of only shrinking the batch tile.
    return tile


def channel_dense_kernel(x_ref, w1_ref, b1_ref, w2_ref, b2_ref,
                         w34t_ref, b34t_ref, ot_ref):
    # Layer 1: (tile, D) @ (D, 256) + b -> ReLU   (f32 accumulate, f32 VPU relu)
    h = jnp.dot(x_ref[...], w1_ref[...],
                preferred_element_type=jnp.float32) + b1_ref[...]
    h = jnp.maximum(h, 0.0)

    # Layer 2: (tile, 256) @ (256, 64) + b -> ReLU
    h = jnp.dot(h, w2_ref[...],
                preferred_element_type=jnp.float32) + b2_ref[...]
    h = jnp.maximum(h, 0.0)

    # Fused layers 3+4, computed TRANSPOSED so the (3, tile) store is
    # lane-dense: out_T = W34^T @ h^T (contract the 64-dim of both operands).
    out_t = jax.lax.dot_general(
        w34t_ref[...], h,
        dimension_numbers=(((1,), (1,)), ((), ())),
        preferred_element_type=jnp.float32) + b34t_ref[...]

    ot_ref[...] = out_t.astype(ot_ref.dtype)


def channel_dense(x, params, *, batch_tile=1024, use_bf16=False):
    """x: (B, D) float32. params: dict of transposed weights / biases.
    Returns (B, 3), same math as the PyTorch module's forward."""
    B, D = x.shape
    out_dtype = x.dtype

    w1, b1 = params["w1"], params["b1"]   # (D,256), (1,256)
    w2, b2 = params["w2"], params["b2"]   # (256,64), (1,64)
    w3, b3 = params["w3"], params["b3"]   # (64,3),  (1,3)
    w4, b4 = params["w4"], params["b4"]   # (3,3),   (1,3)

    # --- algebraic fusion of Linear(64,3) -> Linear(3,3) (no ReLU between) ---
    w34_t = (w3 @ w4).T                    # (3, 64)
    b34_t = (b3 @ w4 + b4).T               # (3, 1)

    # --- optional bf16 for the streamed input only (dominant HBM read);
    #     weights stay f32 (resident + tiny), accumulation stays f32. ---
    x_mm = x.astype(jnp.bfloat16) if use_bf16 else x

    tile = _choose_batch_tile(B, batch_tile, D, x_mm.dtype.itemsize)
    grid = pl.cdiv(B, tile)               # ragged last block handled by Pallas
    vmem_limit = int(min(max(_vmem_bytes(tile, D, x_mm.dtype.itemsize) * 5 // 4,
                             32 << 20), 64 << 20))

    full = lambda arr: pl.BlockSpec(arr.shape, lambda i: (0, 0))
    # TODO(synk): on v7x, mark the resident weight specs pipeline_mode=
    # pl.Buffered(1) (they are fetched once) to halve their VMEM footprint.

    out_t = pl.pallas_call(
        channel_dense_kernel,
        out_shape=jax.ShapeDtypeStruct((N_OUT, B), out_dtype),
        grid_spec=pltpu.PrefetchScalarGridSpec(
            num_scalar_prefetch=0,
            grid=(grid,),
            in_specs=[
                pl.BlockSpec((tile, D), lambda i: (i, 0)),   # streamed x tile
                full(w1), full(b1),
                full(w2), full(b2),
                full(w34_t), full(b34_t),
            ],
            # (3, tile): first dim == full array dim, last dim lane-dense.
            out_specs=pl.BlockSpec((N_OUT, tile), lambda i: (0, i)),
        ),
        compiler_params=pltpu.CompilerParams(
            dimension_semantics=("parallel",),
            vmem_limit_bytes=vmem_limit),
    )(x_mm, w1, b1, w2, b2, w34_t, b34_t)

    # (3, B) -> (B, 3): tiny layout plumbing in the caller (12*B bytes).
    return out_t.T


def init_params(key, input_dim):
    """Deterministic synthetic init (PyTorch-style uniform fan-in bounds)."""
    assert int(input_dim * 0.4) > 3
    dims = [(input_dim, 256), (256, 64), (64, 3), (3, 3)]
    params = {}
    for n, (fan_in, fan_out) in enumerate(dims, start=1):
        key, kw, kb = jax.random.split(key, 3)
        bound = 1.0 / jnp.sqrt(float(fan_in))
        # stored already transposed: (in_features, out_features)
        params[f"w{n}"] = jax.random.uniform(
            kw, (fan_in, fan_out), jnp.float32, -bound, bound)
        params[f"b{n}"] = jax.random.uniform(
            kb, (1, fan_out), jnp.float32, -bound, bound)
    return params


def channel_dense_ref(x, p):
    h = jnp.maximum(x @ p["w1"] + p["b1"], 0.0)
    h = jnp.maximum(h @ p["w2"] + p["b2"], 0.0)
    h = h @ p["w3"] + p["b3"]
    h = h @ p["w4"] + p["b4"]
    return h


if __name__ == "__main__":
    input_dim = 32          # satisfies int(32*0.4)=12 > 3

    key = jax.random.PRNGKey(0)
    key, k1, k2 = jax.random.split(key, 3)
    params = init_params(key, input_dim)

    # Case 1: tiny batch -> single full-array tile (grid == 1).
    x_small = jax.random.normal(k1, (16, input_dim), dtype=jnp.float32)
    out_small = jax.block_until_ready(channel_dense(x_small, params))
    ref_small = channel_dense_ref(x_small, params)
    assert out_small.shape == (16, 3)
    assert jnp.allclose(out_small, ref_small, atol=1e-4, rtol=1e-4), \
        "mismatch vs reference (small)"

    # Case 2: ragged multi-tile batch -> tile=256, grid=2, masked last block.
    x_ragged = jax.random.normal(k2, (300, input_dim), dtype=jnp.float32)
    out_ragged = jax.block_until_ready(channel_dense(x_ragged, params))
    ref_ragged = channel_dense_ref(x_ragged, params)
    assert out_ragged.shape == (300, 3)
    assert jnp.allclose(out_ragged, ref_ragged, atol=1e-4, rtol=1e-4), \
        "mismatch vs reference (ragged)"

    print("KERNEL_OK")
</pallas_src>

<mosaic_0001>
module attributes {stable_mosaic.version = 11 : i64} {
  func.func @channel_dense_kernel(%arg0: i32, %arg1: memref<16x32xf32, #tpu.memory_space<vmem>>, %arg2: memref<32x256xf32, #tpu.memory_space<vmem>>, %arg3: memref<1x256xf32, #tpu.memory_space<vmem>>, %arg4: memref<256x64xf32, #tpu.memory_space<vmem>>, %arg5: memref<1x64xf32, #tpu.memory_space<vmem>>, %arg6: memref<3x64xf32, #tpu.memory_space<vmem>>, %arg7: memref<3x1xf32, #tpu.memory_space<vmem>>, %arg8: memref<3x16xf32, #tpu.memory_space<vmem>>) attributes {dimension_semantics = [#tpu.dimension_semantics<parallel>], iteration_bounds = array<i64: 1>, scalar_prefetch = 0 : i64, scratch_operands = 0 : i64, tpu.core_type = #tpu.core_type<tc>, window_params = [{transform_indices = @transform_0, window_bounds = array<i64: 16, 32>}, {pipeline_mode = #tpu.pipeline_mode<synchronous>, transform_indices = @transform_1, window_bounds = array<i64: 32, 256>}, {pipeline_mode = #tpu.pipeline_mode<synchronous>, transform_indices = @transform_2, window_bounds = array<i64: 1, 256>}, {pipeline_mode = #tpu.pipeline_mode<synchronous>, transform_indices = @transform_3, window_bounds = array<i64: 256, 64>}, {pipeline_mode = #tpu.pipeline_mode<synchronous>, transform_indices = @transform_4, window_bounds = array<i64: 1, 64>}, {pipeline_mode = #tpu.pipeline_mode<synchronous>, transform_indices = @transform_5, window_bounds = array<i64: 3, 64>}, {pipeline_mode = #tpu.pipeline_mode<synchronous>, transform_indices = @transform_6, window_bounds = array<i64: 3, 1>}, {transform_indices = @transform_7, window_bounds = array<i64: 3, 16>}]} {
    %c0 = arith.constant 0 : index
    %c0_0 = arith.constant 0 : index
    %0 = vector.load %arg1[%c0, %c0_0] : memref<16x32xf32, #tpu.memory_space<vmem>>, vector<16x32xf32>
    %c0_1 = arith.constant 0 : index
    %c0_2 = arith.constant 0 : index
    %1 = vector.load %arg2[%c0_1, %c0_2] : memref<32x256xf32, #tpu.memory_space<vmem>>, vector<32x256xf32>
    %cst = arith.constant dense<0.000000e+00> : vector<16x256xf32>
    %2 = tpu.matmul %0, %1, %cst {dimension_numbers = #tpu.dot_dimension_numbers<[1], [0], [0], [1], [0, 0, 1, 1], [], []>} : vector<16x32xf32>, vector<32x256xf32>, vector<16x256xf32> -> vector<16x256xf32>
    %c0_3 = arith.constant 0 : index
    %c0_4 = arith.constant 0 : index
    %3 = vector.load %arg3[%c0_3, %c0_4] : memref<1x256xf32, #tpu.memory_space<vmem>>, vector<1x256xf32>
    %4 = vector.broadcast %3 : vector<1x256xf32> to vector<16x256xf32>
    %5 = arith.addf %2, %4 : vector<16x256xf32>
    %cst_5 = arith.constant 0.000000e+00 : f32
    %6 = vector.broadcast %cst_5 : f32 to vector<16x256xf32>
    %7 = arith.maximumf %5, %6 : vector<16x256xf32>
    %c0_6 = arith.constant 0 : index
    %c0_7 = arith.constant 0 : index
    %8 = vector.load %arg4[%c0_6, %c0_7] : memref<256x64xf32, #tpu.memory_space<vmem>>, vector<256x64xf32>
    %cst_8 = arith.constant dense<0.000000e+00> : vector<16x64xf32>
    %9 = tpu.matmul %7, %8, %cst_8 {dimension_numbers = #tpu.dot_dimension_numbers<[1], [0], [0], [1], [0, 0, 1, 1], [], []>} : vector<16x256xf32>, vector<256x64xf32>, vector<16x64xf32> -> vector<16x64xf32>
    %c0_9 = arith.constant 0 : index
    %c0_10 = arith.constant 0 : index
    %10 = vector.load %arg5[%c0_9, %c0_10] : memref<1x64xf32, #tpu.memory_space<vmem>>, vector<1x64xf32>
    %11 = vector.broadcast %10 : vector<1x64xf32> to vector<16x64xf32>
    %12 = arith.addf %9, %11 : vector<16x64xf32>
    %cst_11 = arith.constant 0.000000e+00 : f32
    %13 = vector.broadcast %cst_11 : f32 to vector<16x64xf32>
    %14 = arith.maximumf %12, %13 : vector<16x64xf32>
    %c0_12 = arith.constant 0 : index
    %c0_13 = arith.constant 0 : index
    %15 = vector.load %arg6[%c0_12, %c0_13] : memref<3x64xf32, #tpu.memory_space<vmem>>, vector<3x64xf32>
    %cst_14 = arith.constant dense<0.000000e+00> : vector<3x16xf32>
    %16 = tpu.matmul %15, %14, %cst_14 {dimension_numbers = #tpu.dot_dimension_numbers<[1], [1], [0], [0], [0, 0, 1, 0], [], []>} : vector<3x64xf32>, vector<16x64xf32>, vector<3x16xf32> -> vector<3x16xf32>
    %c0_15 = arith.constant 0 : index
    %c0_16 = arith.constant 0 : index
    %17 = vector.load %arg7[%c0_15, %c0_16] : memref<3x1xf32, #tpu.memory_space<vmem>>, vector<3x1xf32>
    %18 = vector.broadcast %17 : vector<3x1xf32> to vector<3x16xf32>
    %19 = arith.addf %16, %18 : vector<3x16xf32>
    %c0_17 = arith.constant 0 : index
    %c0_18 = arith.constant 0 : index
    %20 = vector.load %arg8[%c0_17, %c0_18] : memref<3x16xf32, #tpu.memory_space<vmem>>, vector<3x16xf32>
    tpu.vector_store %arg8[%c0_17, %c0_18], %19 {strides = array<i32>} : memref<3x16xf32, #tpu.memory_space<vmem>>, vector<3x16xf32>,
    return
  }
  func.func @transform_0(%arg0: i32) -> (i32, i32) {
    %c0_i32 = arith.constant 0 : i32
    %c0_i32_0 = arith.constant 0 : i32
    return %arg0, %c0_i32 : i32, i32
  }
  func.func @transform_1(%arg0: i32) -> (i32, i32) {
    %c0_i32 = arith.constant 0 : i32
    %c0_i32_0 = arith.constant 0 : i32
    %c0_i32_1 = arith.constant 0 : i32
    return %c0_i32, %c0_i32_0 : i32, i32
  }
  func.func @transform_2(%arg0: i32) -> (i32, i32) {
    %c0_i32 = arith.constant 0 : i32
    %c0_i32_0 = arith.constant 0 : i32
    %c0_i32_1 = arith.constant 0 : i32
    return %c0_i32, %c0_i32_0 : i32, i32
  }
  func.func @transform_3(%arg0: i32) -> (i32, i32) {
    %c0_i32 = arith.constant 0 : i32
    %c0_i32_0 = arith.constant 0 : i32
    %c0_i32_1 = arith.constant 0 : i32
    return %c0_i32, %c0_i32_0 : i32, i32
  }
  func.func @transform_4(%arg0: i32) -> (i32, i32) {
    %c0_i32 = arith.constant 0 : i32
    %c0_i32_0 = arith.constant 0 : i32
    %c0_i32_1 = arith.constant 0 : i32
    return %c0_i32, %c0_i32_0 : i32, i32
  }
  func.func @transform_5(%arg0: i32) -> (i32, i32) {
    %c0_i32 = arith.constant 0 : i32
    %c0_i32_0 = arith.constant 0 : i32
    %c0_i32_1 = arith.constant 0 : i32
    return %c0_i32, %c0_i32_0 : i32, i32
  }
  func.func @transform_6(%arg0: i32) -> (i32, i32) {
    %c0_i32 = arith.constant 0 : i32
    %c0_i32_0 = arith.constant 0 : i32
    %c0_i32_1 = arith.constant 0 : i32
    return %c0_i32, %c0_i32_0 : i32, i32
  }
  func.func @transform_7(%arg0: i32) -> (i32, i32) {
    %c0_i32 = arith.constant 0 : i32
    %c0_i32_0 = arith.constant 0 : i32
    return %c0_i32, %arg0 : i32, i32
  }
}

</mosaic_0001>

<llo_original>
// kernel: tpu_custom_call.1
$region0: #{tpu_custom_call.1}
  #allocation0 [shape = 'u32[]', space=smem, size = 0x4, offset = 0x4, fixed_abs, tag = 'smem constant byte address 0x4 - core index']
  #allocation1 [shape = 'u32[72,128]{1,0:T(1,128)}', space=vmem, size = 0x9000, scoped, tag = 'internal scratch']
  %s0 = inlined_call_operand.vmem [shape: f32[16,32], index: 0, kind: input, shape index: {}]
  %s1 = inlined_call_operand.vmem [shape: f32[32,256], index: 1, kind: input, shape index: {}]
  %s2 = inlined_call_operand.vmem [shape: f32[1,256], index: 2, kind: input, shape index: {}]
  %s3 = inlined_call_operand.vmem [shape: f32[256,64], index: 3, kind: input, shape index: {}]
  %s4 = inlined_call_operand.vmem [shape: f32[1,64], index: 4, kind: input, shape index: {}]
  %s5 = inlined_call_operand.vmem [shape: f32[3,64], index: 5, kind: input, shape index: {}]
  %s6 = inlined_call_operand.vmem [shape: f32[3,1], index: 6, kind: input, shape index: {}]
  %s7 = inlined_call_operand.hbm [shape: f32[3,16], index: 7, kind: output, shape index: {}]
  %s8 = sld [smem:[#allocation0]]
  $region38: #{tpu_custom_call.1} parent=0
    _
  %s10 = ssub.s32 1, %s8
  %s11 = scalar_select 0, %s10, %s8
  $region1: #{tpu_custom_call.1} parent=0
    #allocation2 [shape = 'u8[2048]{0}', space=vmem, size = 0x800, scoped, tag = 'output window, operand 0, single buffered']
    #allocation3 [shape = 's32[1]{0}', space=sflag, size = 0x4, scoped, tag = 'scoped memory for tpu_custom_call.1']
    %12 = vsyncpa [#allocation3], 0
    // Predicated region
    $region2: #{tpu_custom_call.1} parent=1 // pred_check
      _
    $region3: #{tpu_custom_call.1} parent=1 // pred_check_branch
      %14 = sbr.rel (0) target = $region5
    $region4: #{tpu_custom_call.1} parent=1 // pred_region
      _
    $region5: #{tpu_custom_call.1} parent=1 // pred_fallthru
      _
    // Predicated region
    $region6: #{tpu_custom_call.1} parent=1 // pred_check
      _
    $region7: #{tpu_custom_call.1} parent=1 // pred_check_branch
      %16 = sbr.rel (0) target = $region9
    $region8: #{tpu_custom_call.1} parent=1 // pred_region
      _
    $region9: #{tpu_custom_call.1} parent=1 // pred_fallthru
      _
    // Predicated region
    $region10: #{tpu_custom_call.1} parent=1 // pred_check
      _
    $region11: #{tpu_custom_call.1} parent=1 // pred_check_branch
      %18 = sbr.rel (0) target = $region13
    $region12: #{tpu_custom_call.1} parent=1 // pred_region
      _
    $region13: #{tpu_custom_call.1} parent=1 // pred_fallthru
      _
    // Predicated region
    $region14: #{tpu_custom_call.1} parent=1 // pred_check
      _
    $region15: #{tpu_custom_call.1} parent=1 // pred_check_branch
      %20 = sbr.rel (0) target = $region17
    $region16: #{tpu_custom_call.1} parent=1 // pred_region
      _
    $region17: #{tpu_custom_call.1} parent=1 // pred_fallthru
      _
    // Predicated region
    $region18: #{tpu_custom_call.1} parent=1 // pred_check
      _
    $region19: #{tpu_custom_call.1} parent=1 // pred_check_branch
      %22 = sbr.rel (0) target = $region21
    $region20: #{tpu_custom_call.1} parent=1 // pred_region
      _
    $region21: #{tpu_custom_call.1} parent=1 // pred_fallthru
      _
    // Predicated region
    $region22: #{tpu_custom_call.1} parent=1 // pred_check
      _
    $region23: #{tpu_custom_call.1} parent=1 // pred_check_branch
      %24 = sbr.rel (0) target = $region25
    $region24: #{tpu_custom_call.1} parent=1 // pred_region
      _
    $region25: #{tpu_custom_call.1} parent=1 // pred_fallthru
      _
    // Predicated region
    $region26: #{tpu_custom_call.1} parent=1 // pred_check
      _
    $region27: #{tpu_custom_call.1} parent=1 // pred_check_branch
      %26 = sbr.rel (0) target = $region29
    $region28: #{tpu_custom_call.1} parent=1 // pred_region
      _
    $region29: #{tpu_custom_call.1} parent=1 // pred_fallthru
      _
    %v27 = vld [vmem:[%s0] sm:$0xff]
    %v28 = vld [vmem:[%s0 + $0x8] sm:$0xff]
    %v29 = vld [vmem:[%s1] sm:$0xff]
    %v30 = vld [vmem:[%s1 + $0x8] sm:$0xff]
    %v31 = vld [vmem:[%s1 + $0x10] sm:$0xff]
    %v32 = vld [vmem:[%s1 + $0x18] sm:$0xff]
    %v33 = vld [vmem:[%s1 + $0x20] sm:$0xff]
    %v34 = vld [vmem:[%s1 + $0x28] sm:$0xff]
    %v35 = vld [vmem:[%s1 + $0x30] sm:$0xff]
    %v36 = vld [vmem:[%s1 + $0x38] sm:$0xff]
    %v37 = vld [vmem:[%s2] sm:$0x3]
    %v39 = vperm.slane %v37, 0
    %v40 = vperm.slane %v37, 1
    %vm43 = vcmask 261120
    %v45 = vsel %vm43, %v27, 0
    %v48 = vsel %vm43, %v28, 0
    %50 = vmatpush.msra.mxu0 0.0
    %51 = vmatpush.msra.mxu0 0.0
    %52 = vmatpush.msra.mxu0 0.0
    %53 = vmatpush.msra.mxu0 0.0
    %54 = vmatpush.msra.mxu0 0.0
    %55 = vmatpush.msra.mxu0 0.0
    %56 = vmatpush.msra.mxu0 0.0
    %57 = vmatpush.msra.mxu0 0.0
    %58 = vmatpush.msra.mxu0 0.0
    %59 = vmatpush.msra.mxu0 0.0
    %60 = vmatpush.msra.mxu0 0.0
    %61 = vmatpush.msra.mxu0 0.0
    %62 = vmatpush.msra.mxu0 %v35
    %63 = vmatpush.msra.mxu0 %v33
    %64 = vmatpush.msra.mxu0 %v31
    %65 = vmatpush.msra.mxu0 %v29
    %66 = vmatmul.f32.gmra.mxu0 %v45
    %v67 = vpop.f32.mrf.mxu0
    %v68 = vadd.f32 %v39, %v67
    %69 = vmatmul.f32.gmra.mxu0 %v48
    %v70 = vpop.f32.mrf.mxu0
    %v71 = vadd.f32 %v39, %v70
    %72 = vdwg.mxu0
    %73 = vmatpush.msra.mxu0 0.0
    %74 = vmatpush.msra.mxu0 0.0
    %75 = vmatpush.msra.mxu0 0.0
    %76 = vmatpush.msra.mxu0 0.0
    %77 = vmatpush.msra.mxu0 0.0
    %78 = vmatpush.msra.mxu0 0.0
    %79 = vmatpush.msra.mxu0 0.0
    %80 = vmatpush.msra.mxu0 0.0
    %81 = vmatpush.msra.mxu0 0.0
    %82 = vmatpush.msra.mxu0 0.0
    %83 = vmatpush.msra.mxu0 0.0
    %84 = vmatpush.msra.mxu0 0.0
    %85 = vmatpush.msra.mxu0 %v36
    %86 = vmatpush.msra.mxu0 %v34
    %87 = vmatpush.msra.mxu0 %v32
    %88 = vmatpush.msra.mxu0 %v30
    %89 = vmatmul.f32.gmra.mxu0 %v45
    %v90 = vpop.f32.mrf.mxu0
    %v91 = vadd.f32 %v40, %v90
    %92 = vmatmul.f32.gmra.mxu0 %v48
    %v93 = vpop.f32.mrf.mxu0
    %v94 = vadd.f32 %v40, %v93
    %95 = vdwg.mxu0
    %v96 = vmax.f32 %v68, 0.0
    %v97 = vmax.f32 %v91, 0.0
    %v98 = vmax.f32 %v71, 0.0
    %v99 = vmax.f32 %v94, 0.0
    %v100 = vld [vmem:[%s3] sm:$0xff]
    %v101 = vld [vmem:[%s3 + $0x8] sm:$0xff]
    %v102 = vld [vmem:[%s3 + $0x10] sm:$0xff]
    %v103 = vld [vmem:[%s3 + $0x18] sm:$0xff]
    %v104 = vld [vmem:[%s3 + $0x20] sm:$0xff]
    %v105 = vld [vmem:[%s3 + $0x28] sm:$0xff]
    %v106 = vld [vmem:[%s3 + $0x30] sm:$0xff]
    %v107 = vld [vmem:[%s3 + $0x38] sm:$0xff]
    %v108 = vld [vmem:[%s3 + $0x40] sm:$0xff]
    %v109 = vld [vmem:[%s3 + $0x48] sm:$0xff]
    %v110 = vld [vmem:[%s3 + $0x50] sm:$0xff]
    %v111 = vld [vmem:[%s3 + $0x58] sm:$0xff]
    %v112 = vld [vmem:[%s3 + $0x60] sm:$0xff]
    %v113 = vld [vmem:[%s3 + $0x68] sm:$0xff]
    %v114 = vld [vmem:[%s3 + $0x70] sm:$0xff]
    %v115 = vld [vmem:[%s3 + $0x78] sm:$0xff]
    %v116 = vld [vmem:[%s3 + $0x80] sm:$0xff]
    %v117 = vld [vmem:[%s3 + $0x88] sm:$0xff]
    %v118 = vld [vmem:[%s3 + $0x90] sm:$0xff]
    %v119 = vld [vmem:[%s3 + $0x98] sm:$0xff]
    %v120 = vld [vmem:[%s3 + $0xa0] sm:$0xff]
    %v121 = vld [vmem:[%s3 + $0xa8] sm:$0xff]
    %v122 = vld [vmem:[%s3 + $0xb0] sm:$0xff]
    %v123 = vld [vmem:[%s3 + $0xb8] sm:$0xff]
    %v124 = vld [vmem:[%s3 + $0xc0] sm:$0xff]
    %v125 = vld [vmem:[%s3 + $0xc8] sm:$0xff]
    %v126 = vld [vmem:[%s3 + $0xd0] sm:$0xff]
    %v127 = vld [vmem:[%s3 + $0xd8] sm:$0xff]
    %v128 = vld [vmem:[%s3 + $0xe0] sm:$0xff]
    %v129 = vld [vmem:[%s3 + $0xe8] sm:$0xff]
    %v130 = vld [vmem:[%s3 + $0xf0] sm:$0xff]
    %v131 = vld [vmem:[%s3 + $0xf8] sm:$0xff]
    %v132 = vld [vmem:[%s4] sm:$0x1]
    %v134 = vperm.slane %v132, 0
    %136 = vmatpush.msra.mxu0 %v115
    %137 = vmatpush.msra.mxu0 %v114
    %138 = vmatpush.msra.mxu0 %v113
    %139 = vmatpush.msra.mxu0 %v112
    %140 = vmatpush.msra.mxu0 %v111
    %141 = vmatpush.msra.mxu0 %v110
    %142 = vmatpush.msra.mxu0 %v109
    %143 = vmatpush.msra.mxu0 %v108
    %144 = vmatpush.msra.mxu0 %v107
    %145 = vmatpush.msra.mxu0 %v106
    %146 = vmatpush.msra.mxu0 %v105
    %147 = vmatpush.msra.mxu0 %v104
    %148 = vmatpush.msra.mxu0 %v103
    %149 = vmatpush.msra.mxu0 %v102
    %150 = vmatpush.msra.mxu0 %v101
    %151 = vmatpush.msra.mxu0 %v100
    %152 = vmatmul.f32.gmra.mxu0 %v96
    %v153 = vpop.f32.mrf.mxu0
    %v154 = vadd.f32 %v134, %v153
    %155 = vmatmul.f32.gmra.mxu0 %v98
    %v156 = vpop.f32.mrf.mxu0
    %v157 = vadd.f32 %v134, %v156
    %158 = vdwg.mxu0
    %159 = vmatpush.msra.mxu0 %v131
    %160 = vmatpush.msra.mxu0 %v130
    %161 = vmatpush.msra.mxu0 %v129
    %162 = vmatpush.msra.mxu0 %v128
    %163 = vmatpush.msra.mxu0 %v127
    %164 = vmatpush.msra.mxu0 %v126
    %165 = vmatpush.msra.mxu0 %v125
    %166 = vmatpush.msra.mxu0 %v124
    %167 = vmatpush.msra.mxu0 %v123
    %168 = vmatpush.msra.mxu0 %v122
    %169 = vmatpush.msra.mxu0 %v121
    %170 = vmatpush.msra.mxu0 %v120
    %171 = vmatpush.msra.mxu0 %v119
    %172 = vmatpush.msra.mxu0 %v118
    %173 = vmatpush.msra.mxu0 %v117
    %174 = vmatpush.msra.mxu0 %v116
    %175 = vmatmul.f32.gmra.mxu0 %v97
    %v176 = vpop.f32.mrf.mxu0
    %v177 = vadd.f32 %v154, %v176
    %178 = vmatmul.f32.gmra.mxu0 %v99
    %v179 = vpop.f32.mrf.mxu0
    %v180 = vadd.f32 %v157, %v179
    %181 = vdwg.mxu0
    %v182 = vmax.f32 %v177, 0.0
    %v183 = vmax.f32 %v180, 0.0
    %v184 = vld [vmem:[%s5] sm:$0x7]
    %v185 = vld [vmem:[%s6] sm:$0x7]
    %187 = vset.pattern.permute.xlu0 0
    %188 = vperm.xlu0 %187, %v185
    %v189 = vpop.permute.xlu0 %188
    %vm191 = vcmask 523264
    %v193 = vsel %vm191, %v184, 0
    %v196 = vsel %vm191, %v182, 0
    %v199 = vsel %vm191, %v183, 0
    %201 = vmatpush.xpose.msra.mxu0 0.0
    %202 = vmatpush.xpose.msra.mxu0 0.0
    %203 = vmatpush.xpose.msra.mxu0 0.0
    %204 = vmatpush.xpose.msra.mxu0 0.0
    %205 = vmatpush.xpose.msra.mxu0 0.0
    %206 = vmatpush.xpose.msra.mxu0 0.0
    %207 = vmatpush.xpose.msra.mxu0 0.0
    %208 = vmatpush.xpose.msra.mxu0 0.0
    %209 = vmatpush.xpose.msra.mxu0 0.0
    %210 = vmatpush.xpose.msra.mxu0 0.0
    %211 = vmatpush.xpose.msra.mxu0 0.0
    %212 = vmatpush.xpose.msra.mxu0 0.0
    %213 = vmatpush.xpose.msra.mxu0 0.0
    %214 = vmatpush.xpose.msra.mxu0 0.0
    %215 = vmatpush.xpose.msra.mxu0 %v199
    %216 = vmatpush.xpose.msra.mxu0 %v196
    %217 = vmatmul.f32.gmra.mxu0 %v193
    %v218 = vpop.f32.mrf.mxu0
    %v219 = vadd.f32 %v189, %v218
    %220 = vdwg.mxu0
    %vm221 = vcmask 124928
    %222 = vst.msk [vmem:[#allocation2] sm:$0x7] %vm221, %v219
    // Predicated region
    $region30: #{tpu_custom_call.1} parent=1 // pred_check
      _
    $region31: #{tpu_custom_call.1} parent=1 // pred_check_branch
      %224 = sbr.rel (0) target = $region33
    $region32: #{tpu_custom_call.1} parent=1 // pred_region
      %226 = vsyncadd [#allocation3], 0
      %s228 = sshll.u32 [#allocation2], 4
      %s229 = int_to_ptr.vmem [resolvable:$true] %s228
      %s230 = sshll.u32 %s7, 4
      %s231 = int_to_ptr.hbm [resolvable:$true] %s230
      %233 = dma.vmem_to_hbm [thread:$0]  %s229, 64, %s231, [#allocation3]
    $region33: #{tpu_custom_call.1} parent=1 // pred_fallthru
      _
    // Predicated region
    $region34: #{tpu_custom_call.1} parent=1 // pred_check
      _
    $region35: #{tpu_custom_call.1} parent=1 // pred_check_branch
      %235 = sbr.rel (0) target = $region37
    $region36: #{tpu_custom_call.1} parent=1 // pred_region
      %237 = dma.done [#allocation3], 64
    $region37: #{tpu_custom_call.1} parent=1 // pred_fallthru
      _
    %238 = vsyncpa [#allocation3], 1

</llo_original>
